<compile_context>
chip_gen: v7x
topology: tpu7x:2x2x1
jax: 0.10.0
libtpu: 0.0.40
codegen_flags: <defaults>
</compile_context>

<pallas_src>
import functools

import jax
import jax.numpy as jnp
from jax import lax
from jax.experimental import pallas as pl
from jax.experimental.pallas import tpu as pltpu

_LANE = 128
_SUBLANE = 8
_NUM_BITS = 8
_NUM_BINS = float(2 ** _NUM_BITS - 1)        # 255.0
_EPS = 1e-8

# Tiling / dispatch knobs (conservative across v5e / v6e / v7x).
_MAX_BLK_ROWS = 8192                         # (8192,128) f32 block = 4 MiB per pipeline buffer
_FUSED_MAX_BYTES = 2 * 1024 * 1024           # single-pass VMEM-resident threshold (input bytes)
_VMEM_LIMIT = 32 * 1024 * 1024               # explicit scoped-VMEM limit (32 MiB fits every gen)


def _fused_kernel(x_ref, o_ref):
    """Single-pass path: whole (rows,128) slab resident in VMEM.

    Computes the global min/max and the quant->clamp->round->dequant in one launch,
    so HBM traffic is read-N + write-N (2N instead of 3N for the two-pass path).
    """
    x = x_ref[...].astype(jnp.float32)       # in-register upcast keeps HBM traffic narrow
    mn = jnp.min(x) - _EPS                   # zero point
    mx = jnp.max(x) + _EPS
    rng = mx - mn
    scale = _NUM_BINS / rng                  # scalar, hoisted
    inv_scale = rng * (1.0 / _NUM_BINS)      # scalar multiply instead of per-element divide
    y = jnp.round(jnp.clip((x - mn) * scale, 0.0, _NUM_BINS))
    o_ref[...] = (y * inv_scale + mn).astype(o_ref.dtype)


def _block_minmax_kernel(x_ref, vmin_ref, vmax_ref, *, rows, blk_rows):
    """Pass 1 (large-tensor fallback): per-block partial min/max, fully parallel grid.

    Each grid step collapses its (blk_rows,128) block to an (8,128) partial with a
    VALU min/max tree (reshape keeps the (8,128) vreg tiling, so it is free) and
    writes it to its own output slot.  No scratch, no serial accumulation -> the
    grid axis is "parallel" and v7x can shard it across both TensorCores.
    """
    i = pl.program_id(0)
    x = x_ref[...].astype(jnp.float32)
    sub = blk_rows // _SUBLANE

    def _reduce(xmin, xmax):
        vmin_ref[...] = jnp.min(xmin.reshape(sub, _SUBLANE, _LANE), axis=0)
        vmax_ref[...] = jnp.max(xmax.reshape(sub, _SUBLANE, _LANE), axis=0)

    if rows % blk_rows != 0:
        last = pl.num_programs(0) - 1

        # Only the last block can be ragged: pay the iota/mask cost there only.
        @pl.when(i == last)
        def _():
            row_ids = i * blk_rows + lax.broadcasted_iota(jnp.int32, x.shape, 0)
            valid = row_ids < rows
            _reduce(jnp.where(valid, x, jnp.inf), jnp.where(valid, x, -jnp.inf))

        @pl.when(i != last)
        def _():
            _reduce(x, x)
    else:
        _reduce(x, x)


def _quant_dequant_kernel(stats_ref, x_ref, o_ref):
    """Pass 2 (large-tensor fallback): elementwise fake-quant with precomputed min/max."""
    mn = stats_ref[0, 0]                     # zero point (already includes -EPS)
    rng = stats_ref[0, 1] - mn               # (max + EPS) - (min - EPS)
    scale = _NUM_BINS / rng                  # scalar, hoisted
    inv_scale = rng * (1.0 / _NUM_BINS)      # scalar multiply instead of per-element divide
    x = x_ref[...].astype(jnp.float32)
    y = jnp.round(jnp.clip((x - mn) * scale, 0.0, _NUM_BINS))
    o_ref[...] = (y * inv_scale + mn).astype(o_ref.dtype)


@jax.jit
def quant_measure(x):
    """Pallas implementation of QuantMeasure.forward (stochastic=False, inplace=False)."""
    orig_shape = x.shape
    orig_dtype = x.dtype

    xf = x.reshape(-1)                       # row-major flatten; dtype untouched (cast in-kernel)
    n = xf.shape[0]

    lane_pad = (-n) % _LANE
    if lane_pad:
        # Rare for activations (numel % 128 != 0); pad with an existing element so the
        # global min/max are unchanged.
        # TODO(synk): handle the sub-128 tail in-kernel (flat-index mask) to avoid this copy.
        xf = jnp.concatenate([xf, jnp.full((lane_pad,), xf[0], xf.dtype)])

    x2 = xf.reshape(-1, _LANE)               # (rows, 128), lane-dense
    rows = x2.shape[0]
    in_bytes = rows * _LANE * x2.dtype.itemsize

    if in_bytes <= _FUSED_MAX_BYTES:
        # Single launch, whole tensor resident in VMEM.
        out2 = pl.pallas_call(
            _fused_kernel,
            out_shape=jax.ShapeDtypeStruct(x2.shape, orig_dtype),
            grid=(1,),
            in_specs=[pl.BlockSpec((rows, _LANE), lambda i: (0, 0))],
            out_specs=pl.BlockSpec((rows, _LANE), lambda i: (0, 0)),
            compiler_params=pltpu.CompilerParams(
                dimension_semantics=("arbitrary",),
                vmem_limit_bytes=_VMEM_LIMIT),
        )(x2)
    else:
        # Two-pass fallback for tensors too big to sit in VMEM.
        blk_rows = max(_SUBLANE, min(_MAX_BLK_ROWS, (rows // _SUBLANE) * _SUBLANE))
        grid_n = pl.cdiv(rows, blk_rows)

        # Pass 1: per-block partial min/max (fully parallel grid, no scratch).
        vmin, vmax = pl.pallas_call(
            functools.partial(_block_minmax_kernel, rows=rows, blk_rows=blk_rows),
            out_shape=(
                jax.ShapeDtypeStruct((grid_n * _SUBLANE, _LANE), jnp.float32),
                jax.ShapeDtypeStruct((grid_n * _SUBLANE, _LANE), jnp.float32),
            ),
            grid=(grid_n,),
            in_specs=[pl.BlockSpec((blk_rows, _LANE), lambda i: (i, 0))],
            out_specs=(
                pl.BlockSpec((_SUBLANE, _LANE), lambda i: (i, 0)),
                pl.BlockSpec((_SUBLANE, _LANE), lambda i: (i, 0)),
            ),
            compiler_params=pltpu.CompilerParams(
                dimension_semantics=("parallel",),
                vmem_limit_bytes=_VMEM_LIMIT),
        )(x2)

        # Tiny global reduction over the (grid_n*8, 128) partials (negligible vs N).
        mn = jnp.min(vmin) - _EPS
        mx = jnp.max(vmax) + _EPS
        stats = jnp.stack([mn, mx]).astype(jnp.float32).reshape(1, 2)

        # Pass 2: quantize -> clamp -> round -> dequantize (embarrassingly parallel).
        out2 = pl.pallas_call(
            _quant_dequant_kernel,
            out_shape=jax.ShapeDtypeStruct(x2.shape, orig_dtype),
            grid=(grid_n,),
            in_specs=[
                pl.BlockSpec((1, 2), lambda i: (0, 0), memory_space=pltpu.SMEM),
                pl.BlockSpec((blk_rows, _LANE), lambda i: (i, 0)),
            ],
            out_specs=pl.BlockSpec((blk_rows, _LANE), lambda i: (i, 0)),
            compiler_params=pltpu.CompilerParams(
                dimension_semantics=("parallel",),
                vmem_limit_bytes=_VMEM_LIMIT),
        )(stats, x2)

    out = out2.reshape(-1)
    if lane_pad:
        out = out[:n]
    return out.reshape(orig_shape)


def _reference(x):
    """Pure-JAX reference of ScalarPreconditionerAct fake-quant (matches torch path)."""
    xf = x.astype(jnp.float32)
    mn = jnp.min(xf) - _EPS
    mx = jnp.max(xf) + _EPS
    scale = _NUM_BINS / (mx - mn)
    y = jnp.round(jnp.clip((xf - mn) * scale, 0.0, _NUM_BINS))
    return (y / scale + mn).astype(x.dtype)


if __name__ == "__main__":
    key = jax.random.PRNGKey(0)
    # NCHW activation tensor (batch=2, channels=4, spatial=16x16).
    x = jax.random.normal(key, (2, 4, 16, 16), dtype=jnp.float32) * 3.0 + 0.5

    out = jax.block_until_ready(quant_measure(x))

    ref = _reference(x)
    assert out.shape == x.shape and out.dtype == x.dtype
    assert jnp.max(jnp.abs(out - ref)) < 1e-4, "mismatch vs reference"

    # Small ragged case (numel % 128 != 0) exercises the lane-pad fallback.
    x_odd = jax.random.normal(jax.random.PRNGKey(1), (2, 7, 73), dtype=jnp.float32) * 2.0 - 1.0
    out_odd = jax.block_until_ready(quant_measure(x_odd))
    assert out_odd.shape == x_odd.shape and out_odd.dtype == x_odd.dtype
    assert jnp.max(jnp.abs(out_odd - _reference(x_odd))) < 1e-4, "mismatch vs reference (ragged)"

    print("KERNEL_OK")
</pallas_src>

<mosaic_0001>
module attributes {stable_mosaic.version = 11 : i64} {
  func.func @_fused_kernel(%arg0: i32, %arg1: memref<16x128xf32, #tpu.memory_space<vmem>>, %arg2: memref<16x128xf32, #tpu.memory_space<vmem>>) attributes {dimension_semantics = [#tpu.dimension_semantics<arbitrary>], iteration_bounds = array<i64: 1>, scalar_prefetch = 0 : i64, scratch_operands = 0 : i64, tpu.core_type = #tpu.core_type<tc>, window_params = [{pipeline_mode = #tpu.pipeline_mode<synchronous>, transform_indices = @transform_0, window_bounds = array<i64: 16, 128>}, {pipeline_mode = #tpu.pipeline_mode<synchronous>, transform_indices = @transform_1, window_bounds = array<i64: 16, 128>}]} {
    %c0 = arith.constant 0 : index
    %c0_0 = arith.constant 0 : index
    %0 = vector.load %arg1[%c0, %c0_0] : memref<16x128xf32, #tpu.memory_space<vmem>>, vector<16x128xf32>
    %1 = vector.shape_cast %0 : vector<16x128xf32> to vector<1x16x128xf32>
    %cst = arith.constant dense<0x7F800000> : vector<1xf32>
    %2 = vector.multi_reduction <minimumf>, %1, %cst [1, 2] : vector<1x16x128xf32> to vector<1xf32>
    %3 = vector.shape_cast %2 : vector<1xf32> to vector<1x1x1xf32>
    %4 = vector.extract %3[0, 0, 0] : f32 from vector<1x1x1xf32>
    %cst_1 = arith.constant 9.99999993E-9 : f32
    %5 = arith.subf %4, %cst_1 : f32
    %6 = vector.shape_cast %0 : vector<16x128xf32> to vector<1x16x128xf32>
    %cst_2 = arith.constant dense<0xFF800000> : vector<1xf32>
    %7 = vector.multi_reduction <maximumf>, %6, %cst_2 [1, 2] : vector<1x16x128xf32> to vector<1xf32>
    %8 = vector.shape_cast %7 : vector<1xf32> to vector<1x1x1xf32>
    %9 = vector.extract %8[0, 0, 0] : f32 from vector<1x1x1xf32>
    %cst_3 = arith.constant 9.99999993E-9 : f32
    %10 = arith.addf %9, %cst_3 : f32
    %11 = arith.subf %10, %5 : f32
    %cst_4 = arith.constant 2.550000e+02 : f32
    %12 = arith.divf %cst_4, %11 : f32
    %cst_5 = arith.constant 0.00392156886 : f32
    %13 = arith.mulf %11, %cst_5 : f32
    %14 = vector.broadcast %5 : f32 to vector<16x128xf32>
    %15 = arith.subf %0, %14 : vector<16x128xf32>
    %16 = vector.broadcast %12 : f32 to vector<16x128xf32>
    %17 = arith.mulf %15, %16 : vector<16x128xf32>
    %cst_6 = arith.constant 0.000000e+00 : f32
    %cst_7 = arith.constant 2.550000e+02 : f32
    %18 = vector.broadcast %cst_6 : f32 to vector<16x128xf32>
    %19 = arith.maximumf %18, %17 : vector<16x128xf32>
    %20 = vector.broadcast %cst_7 : f32 to vector<16x128xf32>
    %21 = arith.minimumf %20, %19 : vector<16x128xf32>
    %22 = math.roundeven %21 : vector<16x128xf32>
    %23 = vector.broadcast %13 : f32 to vector<16x128xf32>
    %24 = arith.mulf %22, %23 : vector<16x128xf32>
    %25 = vector.broadcast %5 : f32 to vector<16x128xf32>
    %26 = arith.addf %24, %25 : vector<16x128xf32>
    %c0_8 = arith.constant 0 : index
    %c0_9 = arith.constant 0 : index
    %27 = vector.load %arg2[%c0_8, %c0_9] : memref<16x128xf32, #tpu.memory_space<vmem>>, vector<16x128xf32>
    tpu.vector_store %arg2[%c0_8, %c0_9], %26 {strides = array<i32>} : memref<16x128xf32, #tpu.memory_space<vmem>>, vector<16x128xf32>,
    return
  }
  func.func @transform_0(%arg0: i32) -> (i32, i32) {
    %c0_i32 = arith.constant 0 : i32
    %c0_i32_0 = arith.constant 0 : i32
    %c0_i32_1 = arith.constant 0 : i32
    return %c0_i32, %c0_i32_0 : i32, i32
  }
  func.func @transform_1(%arg0: i32) -> (i32, i32) {
    %c0_i32 = arith.constant 0 : i32
    %c0_i32_0 = arith.constant 0 : i32
    %c0_i32_1 = arith.constant 0 : i32
    return %c0_i32, %c0_i32_0 : i32, i32
  }
}

</mosaic_0001>

<llo_original>
// kernel: quant_measure.1
$region0: #{quant_measure.1}
  #allocation0 [shape = 'u32[]', space=smem, size = 0x4, offset = 0x4, fixed_abs, tag = 'smem constant byte address 0x4 - core index']
  #allocation1 [shape = 'u32[144,128]{1,0:T(1,128)}', space=vmem, size = 0x12000, scoped, tag = 'internal scratch']
  %s0 = inlined_call_operand.vmem [shape: f32[16,128], index: 0, kind: input, shape index: {}]
  %s1 = inlined_call_operand.vmem [shape: f32[16,128], index: 1, kind: output, shape index: {}]
  %s2 = sld [smem:[#allocation0]]
  $region14: #{quant_measure.1} parent=0
    _
  %s4 = ssub.s32 1, %s2
  %s5 = scalar_select 0, %s4, %s2
  // Predicated region
  $region2: #{quant_measure.1} parent=0 // pred_check
    _
  $region3: #{quant_measure.1} parent=0 // pred_check_branch
    %7 = sbr.rel (0) target = $region5
  $region4: #{quant_measure.1} parent=0 // pred_region
    _
  $region5: #{quant_measure.1} parent=0 // pred_fallthru
    _
  %v8 = vld [vmem:[%s0] sm:$0xff]
  %v9 = vld [vmem:[%s0 + $0x8] sm:$0xff]
  %v10 = vmin.f32 %v8, %v9
  %11 = vmin.xlane.f32.xlu0 %v10
  %v12 = vpop.xlane.xlu0 %11
  %v13 = vrot.slane %v12, 4
  %v14 = vmin.f32 %v12, %v13
  %v15 = vrot.slane %v14, 2
  %v16 = vmin.f32 %v14, %v15
  %v17 = vrot.slane %v16, 1
  %v18 = vmin.f32 %v16, %v17
  %s19 = vtos %v18
  %s20 = ssub.f32 %s19, 1e-08
  %v21 = vmax.f32 %v8, %v9
  %22 = vmax.xlane.f32.xlu0 %v21
  %v23 = vpop.xlane.xlu0 %22
  %v24 = vrot.slane %v23, 4
  %v25 = vmax.f32 %v23, %v24
  %v26 = vrot.slane %v25, 2
  %v27 = vmax.f32 %v25, %v26
  %v28 = vrot.slane %v27, 1
  %v29 = vmax.f32 %v27, %v28
  %s30 = vtos %v29
  %s31 = sadd.f32 %s30, 1e-08
  %s32 = ssub.f32 %s31, %s20
  %v33 = vstv %s32
  %v34 = vrcp.pop %v33
  %s35 = vtos %v34
  %s36 = smul.f32 255.0, %s35
  %s37 = smul.f32 %s32, 0.003921569
  %v38 = vstv %s20
  %v39 = vsub.f32 %v8, %v38
  %v40 = vsub.f32 %v9, %v38
  %v41 = vstv %s36
  %v42 = vmul.f32 %v39, %v41
  %v43 = vmul.f32 %v40, %v41
  %v44 = vmax.f32 %v42, 0.0
  %v45 = vmax.f32 %v43, 0.0
  %v46 = vmin.f32 %v44, 255.0
  %v47 = vmin.f32 %v45, 255.0
  %v48 = vround.ne.pseudo %v46
  %v49 = vround.ne.pseudo %v47
  %v50 = vstv %s37
  %v51 = vmul.f32 %v48, %v50
  %v52 = vmul.f32 %v49, %v50
  %v53 = vadd.f32 %v51, %v38
  %v54 = vadd.f32 %v52, %v38
  %55 = vst [vmem:[%s1] sm:$0xff] %v53
  %56 = vst [vmem:[%s1 + $0x8] sm:$0xff] %v54
  // Predicated region
  $region6: #{quant_measure.1} parent=0 // pred_check
    _
  $region7: #{quant_measure.1} parent=0 // pred_check_branch
    %58 = sbr.rel (0) target = $region9
  $region8: #{quant_measure.1} parent=0 // pred_region
    _
  $region9: #{quant_measure.1} parent=0 // pred_fallthru
    _
  // Predicated region
  $region10: #{quant_measure.1} parent=0 // pred_check
    _
  $region11: #{quant_measure.1} parent=0 // pred_check_branch
    %60 = sbr.rel (0) target = $region13
  $region12: #{quant_measure.1} parent=0 // pred_region
    _
  $region13: #{quant_measure.1} parent=0 // pred_fallthru
    _

</llo_original>
